<compile_context>
chip_gen: v7x
topology: tpu7x:2x2x1
jax: 0.10.0
libtpu: 0.0.40
codegen_flags: <defaults>
</compile_context>

<pallas_src>
import numpy as np
import jax
import jax.numpy as jnp
from jax.experimental import pallas as pl
from jax.experimental.pallas import tpu as pltpu


def _fused_kernel(x_ref, w_ref, b_ref, kt_ref, o_ref, z_ref):
    # x_ref : (N, Cin, HWin)            whole batch, flattened spatial dims
    # w_ref : (Cout_pad, Cin)           1x1 conv weight, rows >= num_classes are zero
    # b_ref : (Cout_pad, 1)             conv bias (folded through the resize; KT columns sum to 1)
    # kt_ref: (HWin, HWout_pad)         kron(Wh^T, Ww^T), columns >= HWout are zero
    # o_ref : (N*Cout_pad, HWout_pad)   lane-dense (multiple-of-128) output slab
    # z_ref : (N*Cout_pad, HWin)        VMEM scratch holding the stacked conv output
    w = w_ref[...]
    b = b_ref[...]
    n_batch = x_ref.shape[0]
    cp = w.shape[0]
    # 1x1 conv for every batch element; bias added here passes through the resize
    # unchanged because every real KT column sums to 1 (padded columns are zero and
    # get sliced away in the wrapper).  Static unroll over N (N is tiny).
    for n in range(n_batch):
        z_ref[n * cp:(n + 1) * cp, :] = (
            jnp.dot(w, x_ref[n], preferred_element_type=jnp.float32) + b
        )
    # Single stacked resize matmul: (N*Cout_pad, HWin) @ (HWin, HWout_pad).
    o_ref[...] = jnp.dot(
        z_ref[...], kt_ref[...], preferred_element_type=jnp.float32
    ).astype(o_ref.dtype)


def _interp_matrix_np(out_size, in_size):
    """1-D interpolation matrix (out, in) matching F.interpolate(mode='bilinear',
    align_corners=False), including the negative-source clamp and edge handling."""
    d = np.arange(out_size, dtype=np.float64)
    src = (d + 0.5) * (in_size / out_size) - 0.5
    src = np.maximum(src, 0.0)                               # PyTorch clamps negative coords
    i0 = np.clip(np.floor(src).astype(np.int64), 0, in_size - 1)
    i1 = np.minimum(i0 + 1, in_size - 1)
    l1 = src - i0
    l0 = 1.0 - l1
    m = np.zeros((out_size, in_size), dtype=np.float64)
    rows = np.arange(out_size)
    m[rows, i0] += l0
    m[rows, i1] += l1                                        # i1 == i0 at edges -> rows sum to 1
    return m.astype(np.float32)


def make_resize_operator(hin, win, hout, wout):
    """Host-side constants (built once): lane-padded Kronecker resize operator + 1-D matrices."""
    wh = _interp_matrix_np(hout, hin)                        # (Hout, Hin)
    ww = _interp_matrix_np(wout, win)                        # (Wout, Win)
    kt = np.kron(wh.T, ww.T)                                 # (Hin*Win, Hout*Wout)
    hwout = hout * wout
    hwout_pad = -(-hwout // 128) * 128                       # lane-dense: multiple of 128
    kt_pad = np.zeros((hin * win, hwout_pad), dtype=np.float32)
    kt_pad[:, :hwout] = kt
    return jnp.asarray(kt_pad), jnp.asarray(wh), jnp.asarray(ww)


def prepare_conv_params(conv_w, conv_b):
    """Pad Cout up to a multiple of 8 (sublane tile) once at setup time so the per-batch
    conv blocks stack on aligned row boundaries inside the kernel."""
    cout, cin = conv_w.shape
    cpad = -(-cout // 8) * 8
    w_pad = jnp.zeros((cpad, cin), jnp.float32).at[:cout].set(conv_w)
    b_pad = jnp.zeros((cpad, 1), jnp.float32).at[:cout, 0].set(conv_b)
    return w_pad, b_pad


def seg_decoder_forward(x, w_pad, b_pad, kt_pad, num_classes, image_height, image_width):
    """x: (N, Cin, Hin, Win) f32 -> (N, num_classes, image_height, image_width) f32."""
    N, Cin, Hin, Win = x.shape
    CP = w_pad.shape[0]
    HWin = Hin * Win
    HWout = image_height * image_width
    HWout_pad = kt_pad.shape[1]
    assert kt_pad.shape[0] == HWin

    # nn.Dropout2d(0.1) is the identity at inference time (eval mode).
    # TODO(synk): training-mode channel dropout (zeroing whole channels) is not implemented.

    x_flat = x.reshape(N, Cin, HWin)                         # free (contiguous) reshape

    out = pl.pallas_call(
        _fused_kernel,
        out_shape=jax.ShapeDtypeStruct((N * CP, HWout_pad), jnp.float32),
        in_specs=[
            pl.BlockSpec(memory_space=pltpu.MemorySpace.VMEM),   # x
            pl.BlockSpec(memory_space=pltpu.MemorySpace.VMEM),   # conv weight (padded)
            pl.BlockSpec(memory_space=pltpu.MemorySpace.VMEM),   # conv bias (padded)
            pl.BlockSpec(memory_space=pltpu.MemorySpace.VMEM),   # resize operator (padded)
        ],
        out_specs=pl.BlockSpec(memory_space=pltpu.MemorySpace.VMEM),
        scratch_shapes=[pltpu.VMEM((N * CP, HWin), jnp.float32)],
    )(x_flat, w_pad, b_pad, kt_pad)

    # Drop channel / lane padding and restore the (N, C, H, W) image layout.
    out = out.reshape(N, CP, HWout_pad)[:, :num_classes, :HWout]
    return out.reshape(N, num_classes, image_height, image_width)


if __name__ == "__main__":
    # SegDecoder(image_height=20, image_width=24, num_classes=5,
    #            prior_feat_channels=4, refine_layers=3)
    N = 2
    prior_feat_channels, refine_layers = 4, 3
    Cin = prior_feat_channels * refine_layers          # 12
    num_classes = 5
    Hin, Win = 8, 10                                    # input feature-map spatial size
    image_height, image_width = 20, 24                  # target (image) size

    key = jax.random.PRNGKey(0)
    kx, kw, kb = jax.random.split(key, 3)
    x = jax.random.normal(kx, (N, Cin, Hin, Win), dtype=jnp.float32)
    # Conv2d(Cin, num_classes, kernel_size=1): weight (Cout, Cin, 1, 1) stored squeezed (Cout, Cin)
    conv_w = 0.1 * jax.random.normal(kw, (num_classes, Cin), dtype=jnp.float32)
    conv_b = 0.01 * jax.random.normal(kb, (num_classes,), dtype=jnp.float32)

    # Constants prepared once (hoisted out of the forward).
    kt_pad, wh, ww = make_resize_operator(Hin, Win, image_height, image_width)
    w_pad, b_pad = prepare_conv_params(conv_w, conv_b)

    out = seg_decoder_forward(x, w_pad, b_pad, kt_pad,
                              num_classes, image_height, image_width)
    out = jax.block_until_ready(out)

    # pure-JAX reference of the same math (conv1x1 + separable bilinear resize)
    z_ref = jnp.einsum('ok,nkhw->nohw', conv_w, x) + conv_b[None, :, None, None]
    ref = jnp.einsum('ph,nohw,qw->nopq', wh, z_ref, ww)

    assert out.shape == (N, num_classes, image_height, image_width)
    max_err = float(jnp.max(jnp.abs(out - ref)))
    assert jnp.allclose(out, ref, atol=1e-4, rtol=1e-4), max_err
    print("KERNEL_OK")
</pallas_src>

<mosaic_0001>
module attributes {stable_mosaic.version = 11 : i64} {
  func.func @_fused_kernel(%arg0: memref<2x12x80xf32, #tpu.memory_space<vmem>>, %arg1: memref<8x12xf32, #tpu.memory_space<vmem>>, %arg2: memref<8x1xf32, #tpu.memory_space<vmem>>, %arg3: memref<80x512xf32, #tpu.memory_space<vmem>>, %arg4: memref<16x512xf32, #tpu.memory_space<vmem>>, %arg5: memref<16x80xf32, #tpu.memory_space<vmem>>) attributes {dimension_semantics = [], scalar_prefetch = 0 : i64, scratch_operands = 1 : i64, tpu.core_type = #tpu.core_type<tc>} {
    %c0 = arith.constant 0 : index
    %c0_0 = arith.constant 0 : index
    %0 = vector.load %arg1[%c0, %c0_0] : memref<8x12xf32, #tpu.memory_space<vmem>>, vector<8x12xf32>
    %c0_1 = arith.constant 0 : index
    %c0_2 = arith.constant 0 : index
    %1 = vector.load %arg2[%c0_1, %c0_2] : memref<8x1xf32, #tpu.memory_space<vmem>>, vector<8x1xf32>
    %c0_3 = arith.constant 0 : index
    %c0_4 = arith.constant 0 : index
    %c0_5 = arith.constant 0 : index
    %2 = vector.load %arg0[%c0_3, %c0_4, %c0_5] : memref<2x12x80xf32, #tpu.memory_space<vmem>>, vector<1x12x80xf32>
    %3 = vector.shape_cast %2 : vector<1x12x80xf32> to vector<12x80xf32>
    %cst = arith.constant dense<0.000000e+00> : vector<8x80xf32>
    %4 = tpu.matmul %0, %3, %cst {dimension_numbers = #tpu.dot_dimension_numbers<[1], [0], [0], [1], [0, 0, 1, 1], [], []>} : vector<8x12xf32>, vector<12x80xf32>, vector<8x80xf32> -> vector<8x80xf32>
    %5 = vector.broadcast %1 : vector<8x1xf32> to vector<8x80xf32>
    %6 = arith.addf %4, %5 : vector<8x80xf32>
    %c0_6 = arith.constant 0 : index
    %c0_7 = arith.constant 0 : index
    %7 = vector.load %arg5[%c0_6, %c0_7] : memref<16x80xf32, #tpu.memory_space<vmem>>, vector<8x80xf32>
    tpu.vector_store %arg5[%c0_6, %c0_7], %6 {strides = array<i32>} : memref<16x80xf32, #tpu.memory_space<vmem>>, vector<8x80xf32>,
    %c1 = arith.constant 1 : index
    %c0_8 = arith.constant 0 : index
    %c0_9 = arith.constant 0 : index
    %8 = vector.load %arg0[%c1, %c0_8, %c0_9] : memref<2x12x80xf32, #tpu.memory_space<vmem>>, vector<1x12x80xf32>
    %9 = vector.shape_cast %8 : vector<1x12x80xf32> to vector<12x80xf32>
    %cst_10 = arith.constant dense<0.000000e+00> : vector<8x80xf32>
    %10 = tpu.matmul %0, %9, %cst_10 {dimension_numbers = #tpu.dot_dimension_numbers<[1], [0], [0], [1], [0, 0, 1, 1], [], []>} : vector<8x12xf32>, vector<12x80xf32>, vector<8x80xf32> -> vector<8x80xf32>
    %11 = vector.broadcast %1 : vector<8x1xf32> to vector<8x80xf32>
    %12 = arith.addf %10, %11 : vector<8x80xf32>
    %c8 = arith.constant 8 : index
    %c0_11 = arith.constant 0 : index
    %13 = vector.load %arg5[%c8, %c0_11] : memref<16x80xf32, #tpu.memory_space<vmem>>, vector<8x80xf32>
    tpu.vector_store %arg5[%c8, %c0_11], %12 {strides = array<i32>} : memref<16x80xf32, #tpu.memory_space<vmem>>, vector<8x80xf32>,
    %c0_12 = arith.constant 0 : index
    %c0_13 = arith.constant 0 : index
    %14 = vector.load %arg5[%c0_12, %c0_13] : memref<16x80xf32, #tpu.memory_space<vmem>>, vector<16x80xf32>
    %c0_14 = arith.constant 0 : index
    %c0_15 = arith.constant 0 : index
    %15 = vector.load %arg3[%c0_14, %c0_15] : memref<80x512xf32, #tpu.memory_space<vmem>>, vector<80x512xf32>
    %cst_16 = arith.constant dense<0.000000e+00> : vector<16x512xf32>
    %16 = tpu.matmul %14, %15, %cst_16 {dimension_numbers = #tpu.dot_dimension_numbers<[1], [0], [0], [1], [0, 0, 1, 1], [], []>} : vector<16x80xf32>, vector<80x512xf32>, vector<16x512xf32> -> vector<16x512xf32>
    %c0_17 = arith.constant 0 : index
    %c0_18 = arith.constant 0 : index
    %17 = vector.load %arg4[%c0_17, %c0_18] : memref<16x512xf32, #tpu.memory_space<vmem>>, vector<16x512xf32>
    tpu.vector_store %arg4[%c0_17, %c0_18], %16 {strides = array<i32>} : memref<16x512xf32, #tpu.memory_space<vmem>>, vector<16x512xf32>,
    return
  }
}

</mosaic_0001>

<llo_original>
// kernel: tpu_custom_call.1
$region0: #{tpu_custom_call.1}
  #allocation0 [shape = 'u32[]', space=smem, size = 0x4, offset = 0x4, fixed_abs, tag = 'smem constant byte address 0x4 - core index']
  #allocation1 [shape = 'u32[144,128]{1,0:T(1,128)}', space=vmem, size = 0x12000, scoped, tag = 'internal scratch']
  #allocation2 [shape = 'f32[16,80]{1,0:T(8,128)}', space=vmem, size = 0x2000, scoped, tag = 'scratch operand']
  %s0 = inlined_call_operand.vmem [shape: f32[2,12,80], index: 0, kind: input, shape index: {}]
  %s1 = inlined_call_operand.vmem [shape: f32[8,12], index: 1, kind: input, shape index: {}]
  %s2 = inlined_call_operand.vmem [shape: f32[8,1], index: 2, kind: input, shape index: {}]
  %s3 = inlined_call_operand.hbm [shape: f32[80,512], index: 3, kind: input, shape index: {}]
  %s4 = inlined_call_operand.hbm [shape: f32[16,512], index: 4, kind: output, shape index: {}]
  %s5 = sld [smem:[#allocation0]]
  $region30: #{tpu_custom_call.1} parent=0
    _
  %s7 = ssub.s32 1, %s5
  %s8 = scalar_select 0, %s7, %s5
  $region1: #{tpu_custom_call.1} parent=0
    #allocation3 [shape = 'u8[163840]{0}', space=vmem, size = 0x28000, scoped, tag = 'input window, operand 3, single buffered']
    #allocation4 [shape = 's32[1]{0}', space=sflag, size = 0x4, scoped, tag = 'scoped memory for tpu_custom_call.1']
    #allocation5 [shape = 's32[1]{0}', space=sflag, size = 0x4, scoped, tag = 'scoped memory for tpu_custom_call.1']
    #allocation6 [shape = 'u8[32768]{0}', space=vmem, size = 0x8000, scoped, tag = 'output window, operand 0, single buffered']
    %9 = vsyncpa [#allocation4], 0
    %10 = vsyncpa [#allocation5], 0
    // Predicated region
    $region2: #{tpu_custom_call.1} parent=1 // pred_check
      _
    $region3: #{tpu_custom_call.1} parent=1 // pred_check_branch
      %12 = sbr.rel (0) target = $region5
    $region4: #{tpu_custom_call.1} parent=1 // pred_region
      _
    $region5: #{tpu_custom_call.1} parent=1 // pred_fallthru
      _
    // Predicated region
    $region6: #{tpu_custom_call.1} parent=1 // pred_check
      _
    $region7: #{tpu_custom_call.1} parent=1 // pred_check_branch
      %14 = sbr.rel (0) target = $region9
    $region8: #{tpu_custom_call.1} parent=1 // pred_region
      _
    $region9: #{tpu_custom_call.1} parent=1 // pred_fallthru
      _
    // Predicated region
    $region10: #{tpu_custom_call.1} parent=1 // pred_check
      _
    $region11: #{tpu_custom_call.1} parent=1 // pred_check_branch
      %16 = sbr.rel (0) target = $region13
    $region12: #{tpu_custom_call.1} parent=1 // pred_region
      _
    $region13: #{tpu_custom_call.1} parent=1 // pred_fallthru
      _
    // Predicated region
    $region14: #{tpu_custom_call.1} parent=1 // pred_check
      _
    $region15: #{tpu_custom_call.1} parent=1 // pred_check_branch
      %18 = sbr.rel (0) target = $region17
    $region16: #{tpu_custom_call.1} parent=1 // pred_region
      %s20 = ssub.s32 5120, 5120
      %21 = vsyncadd [#allocation4], %s20
      %s22 = sshll.u32 [#allocation3], 4
      %s23 = int_to_ptr.vmem [resolvable:$true] %s22
      %28 = dma.hbm_to_vmem [thread:$0]  %s3, 5120, %s23, [#allocation4], 512, 512, 32
    $region17: #{tpu_custom_call.1} parent=1 // pred_fallthru
      _
    // Predicated region
    $region18: #{tpu_custom_call.1} parent=1 // pred_check
      _
    $region19: #{tpu_custom_call.1} parent=1 // pred_check_branch
      %30 = sbr.rel (0) target = $region21
    $region20: #{tpu_custom_call.1} parent=1 // pred_region
      %31 = dma.done [#allocation4], 5120
    $region21: #{tpu_custom_call.1} parent=1 // pred_fallthru
      _
    %v32 = vld [vmem:[%s1] sm:$0xff]
    %v33 = vld [vmem:[%s2] sm:$0xff]
    %v34 = vld [vmem:[%s0] sm:$0xff]
    %v35 = vld [vmem:[%s0 + $0x8] sm:$0xf]
    %37 = vset.pattern.permute.xlu0 0
    %38 = vperm.xlu0 %37, %v33
    %v39 = vpop.permute.xlu0 %38
    %vm41 = vcmask 97280
    %v43 = vsel %vm41, %v32, 0
    %vm45 = vcmask 1043456
    %v47 = vsel %vm45, %v35, 0
    %49 = vmatprep.subr.mxu0 0.0
    %50 = vmatpush1.msra.mxu0 %v34
    %51 = vmatprep.subr.mxu0 0.0
    %52 = vmatpush1.msra.mxu0 %v47
    %53 = vmatprep.subr.mxu0 0.0
    %54 = vmatpush1.msra.mxu0 0.0
    %55 = vmatprep.subr.mxu0 0.0
    %56 = vmatpush1.msra.mxu0 0.0
    %57 = vmatprep.subr.mxu0 0.0
    %58 = vmatpush1.msra.mxu0 0.0
    %59 = vmatprep.subr.mxu0 0.0
    %60 = vmatpush1.msra.mxu0 0.0
    %61 = vmatprep.subr.mxu0 0.0
    %62 = vmatpush1.msra.mxu0 0.0
    %63 = vmatprep.subr.mxu0 0.0
    %64 = vmatpush1.msra.mxu0 0.0
    %65 = vmatprep.subr.mxu0 0.0
    %66 = vmatpush1.msra.mxu0 0.0
    %67 = vmatprep.subr.mxu0 0.0
    %68 = vmatpush1.msra.mxu0 0.0
    %69 = vmatprep.subr.mxu0 0.0
    %70 = vmatpush1.msra.mxu0 0.0
    %71 = vmatprep.subr.mxu0 0.0
    %72 = vmatpush1.msra.mxu0 0.0
    %73 = vmatprep.subr.mxu0 0.0
    %74 = vmatpush1.msra.mxu0 0.0
    %75 = vmatprep.subr.mxu0 0.0
    %76 = vmatpush1.msra.mxu0 0.0
    %77 = vmatprep.subr.mxu0 0.0
    %78 = vmatpush1.msra.mxu0 0.0
    %79 = vmatprep.subr.mxu0 0.0
    %80 = vmatpush1.msra.mxu0 0.0
    %81 = vmatprep.subr.mxu0 0.0
    %82 = vmatpush1.msra.mxu0 0.0
    %83 = vmatprep.subr.mxu0 0.0
    %84 = vmatpush1.msra.mxu0 0.0
    %85 = vmatprep.subr.mxu0 0.0
    %86 = vmatpush1.msra.mxu0 0.0
    %87 = vmatprep.subr.mxu0 0.0
    %88 = vmatpush1.msra.mxu0 0.0
    %89 = vmatprep.subr.mxu0 0.0
    %90 = vmatpush1.msra.mxu0 0.0
    %91 = vmatprep.subr.mxu0 0.0
    %92 = vmatpush1.msra.mxu0 0.0
    %93 = vmatprep.subr.mxu0 0.0
    %94 = vmatpush1.msra.mxu0 0.0
    %95 = vmatprep.subr.mxu0 0.0
    %96 = vmatpush1.msra.mxu0 0.0
    %97 = vmatprep.subr.mxu0 0.0
    %98 = vmatpush1.msra.mxu0 0.0
    %99 = vmatprep.subr.mxu0 0.0
    %100 = vmatpush1.msra.mxu0 0.0
    %101 = vmatprep.subr.mxu0 0.0
    %102 = vmatpush1.msra.mxu0 0.0
    %103 = vmatprep.subr.mxu0 0.0
    %104 = vmatpush1.msra.mxu0 0.0
    %105 = vmatprep.subr.mxu0 0.0
    %106 = vmatpush1.msra.mxu0 0.0
    %107 = vmatprep.subr.mxu0 0.0
    %108 = vmatpush1.msra.mxu0 0.0
    %109 = vmatprep.subr.mxu0 0.0
    %110 = vmatpush1.msra.mxu0 0.0
    %111 = vmatprep.subr.mxu0 0.0
    %112 = vmatpush1.msra.mxu0 0.0
    %113 = vmatprep.mubr.f32.mxu0 0.0
    %114 = vmatmul.mubr.f32.gmra.mrb[0].mxu0 %v43
    %v115 = vpop.f32.mrb[0].mxu0
    %v116 = vadd.f32 %v39, %v115
    %v117 = vpop.f32.mrb[0].mxu0
    %118 = vdwg.mxu0
    %vm119 = vcmask 654336
    %120 = vst.msk [vmem:[#allocation2] sm:$0xff] %vm119, %v116
    %s121 = scalar_lea.vmem %s0, 16
    %v122 = vld [vmem:[%s121] sm:$0xff]
    %v123 = vld [vmem:[%s121 + $0x8] sm:$0xf]
    %v125 = vsel %vm45, %v123, 0
    %127 = vmatprep.subr.mxu0 0.0
    %128 = vmatpush1.msra.mxu0 %v122
    %129 = vmatprep.subr.mxu0 0.0
    %130 = vmatpush1.msra.mxu0 %v125
    %131 = vmatprep.subr.mxu0 0.0
    %132 = vmatpush1.msra.mxu0 0.0
    %133 = vmatprep.subr.mxu0 0.0
    %134 = vmatpush1.msra.mxu0 0.0
    %135 = vmatprep.subr.mxu0 0.0
    %136 = vmatpush1.msra.mxu0 0.0
    %137 = vmatprep.subr.mxu0 0.0
    %138 = vmatpush1.msra.mxu0 0.0
    %139 = vmatprep.subr.mxu0 0.0
    %140 = vmatpush1.msra.mxu0 0.0
    %141 = vmatprep.subr.mxu0 0.0
    %142 = vmatpush1.msra.mxu0 0.0
    %143 = vmatprep.subr.mxu0 0.0
    %144 = vmatpush1.msra.mxu0 0.0
    %145 = vmatprep.subr.mxu0 0.0
    %146 = vmatpush1.msra.mxu0 0.0
    %147 = vmatprep.subr.mxu0 0.0
    %148 = vmatpush1.msra.mxu0 0.0
    %149 = vmatprep.subr.mxu0 0.0
    %150 = vmatpush1.msra.mxu0 0.0
    %151 = vmatprep.subr.mxu0 0.0
    %152 = vmatpush1.msra.mxu0 0.0
    %153 = vmatprep.subr.mxu0 0.0
    %154 = vmatpush1.msra.mxu0 0.0
    %155 = vmatprep.subr.mxu0 0.0
    %156 = vmatpush1.msra.mxu0 0.0
    %157 = vmatprep.subr.mxu0 0.0
    %158 = vmatpush1.msra.mxu0 0.0
    %159 = vmatprep.subr.mxu0 0.0
    %160 = vmatpush1.msra.mxu0 0.0
    %161 = vmatprep.subr.mxu0 0.0
    %162 = vmatpush1.msra.mxu0 0.0
    %163 = vmatprep.subr.mxu0 0.0
    %164 = vmatpush1.msra.mxu0 0.0
    %165 = vmatprep.subr.mxu0 0.0
    %166 = vmatpush1.msra.mxu0 0.0
    %167 = vmatprep.subr.mxu0 0.0
    %168 = vmatpush1.msra.mxu0 0.0
    %169 = vmatprep.subr.mxu0 0.0
    %170 = vmatpush1.msra.mxu0 0.0
    %171 = vmatprep.subr.mxu0 0.0
    %172 = vmatpush1.msra.mxu0 0.0
    %173 = vmatprep.subr.mxu0 0.0
    %174 = vmatpush1.msra.mxu0 0.0
    %175 = vmatprep.subr.mxu0 0.0
    %176 = vmatpush1.msra.mxu0 0.0
    %177 = vmatprep.subr.mxu0 0.0
    %178 = vmatpush1.msra.mxu0 0.0
    %179 = vmatprep.subr.mxu0 0.0
    %180 = vmatpush1.msra.mxu0 0.0
    %181 = vmatprep.subr.mxu0 0.0
    %182 = vmatpush1.msra.mxu0 0.0
    %183 = vmatprep.subr.mxu0 0.0
    %184 = vmatpush1.msra.mxu0 0.0
    %185 = vmatprep.subr.mxu0 0.0
    %186 = vmatpush1.msra.mxu0 0.0
    %187 = vmatprep.subr.mxu0 0.0
    %188 = vmatpush1.msra.mxu0 0.0
    %189 = vmatprep.subr.mxu0 0.0
    %190 = vmatpush1.msra.mxu0 0.0
    %191 = vmatprep.mubr.f32.mxu0 0.0
    %192 = vmatmul.mubr.f32.gmra.mrb[0].mxu0 %v43
    %v193 = vpop.f32.mrb[0].mxu0
    %v194 = vadd.f32 %v39, %v193
    %v195 = vpop.f32.mrb[0].mxu0
    %196 = vdwg.mxu0
    %197 = vst.msk [vmem:[#allocation2 + $0x8] sm:$0xff] %vm119, %v194
    %v198 = vld [vmem:[#allocation2] sm:$0xff]
    %v199 = vld [vmem:[#allocation2 + $0x8] sm:$0xff]
    %v200 = vld [vmem:[#allocation3] sm:$0xff]
    %v201 = vld [vmem:[#allocation3 + $0x8] sm:$0xff]
    %v202 = vld [vmem:[#allocation3 + $0x10] sm:$0xff]
    %v203 = vld [vmem:[#allocation3 + $0x18] sm:$0xff]
    %v204 = vld [vmem:[#allocation3 + $0x20] sm:$0xff]
    %v205 = vld [vmem:[#allocation3 + $0x28] sm:$0xff]
    %v206 = vld [vmem:[#allocation3 + $0x30] sm:$0xff]
    %v207 = vld [vmem:[#allocation3 + $0x38] sm:$0xff]
    %v208 = vld [vmem:[#allocation3 + $0x40] sm:$0xff]
    %v209 = vld [vmem:[#allocation3 + $0x48] sm:$0xff]
    %v210 = vld [vmem:[#allocation3 + $0x50] sm:$0xff]
    %v211 = vld [vmem:[#allocation3 + $0x58] sm:$0xff]
    %v212 = vld [vmem:[#allocation3 + $0x60] sm:$0xff]
    %v213 = vld [vmem:[#allocation3 + $0x68] sm:$0xff]
    %v214 = vld [vmem:[#allocation3 + $0x70] sm:$0xff]
    %v215 = vld [vmem:[#allocation3 + $0x78] sm:$0xff]
    %v216 = vld [vmem:[#allocation3 + $0x80] sm:$0xff]
    %v217 = vld [vmem:[#allocation3 + $0x88] sm:$0xff]
    %v218 = vld [vmem:[#allocation3 + $0x90] sm:$0xff]
    %v219 = vld [vmem:[#allocation3 + $0x98] sm:$0xff]
    %v220 = vld [vmem:[#allocation3 + $0xa0] sm:$0xff]
    %v221 = vld [vmem:[#allocation3 + $0xa8] sm:$0xff]
    %v222 = vld [vmem:[#allocation3 + $0xb0] sm:$0xff]
    %v223 = vld [vmem:[#allocation3 + $0xb8] sm:$0xff]
    %v224 = vld [vmem:[#allocation3 + $0xc0] sm:$0xff]
    %v225 = vld [vmem:[#allocation3 + $0xc8] sm:$0xff]
    %v226 = vld [vmem:[#allocation3 + $0xd0] sm:$0xff]
    %v227 = vld [vmem:[#allocation3 + $0xd8] sm:$0xff]
    %v228 = vld [vmem:[#allocation3 + $0xe0] sm:$0xff]
    %v229 = vld [vmem:[#allocation3 + $0xe8] sm:$0xff]
    %v230 = vld [vmem:[#allocation3 + $0xf0] sm:$0xff]
    %v231 = vld [vmem:[#allocation3 + $0xf8] sm:$0xff]
    %v232 = vld [vmem:[#allocation3 + $0x100] sm:$0xff]
    %v233 = vld [vmem:[#allocation3 + $0x108] sm:$0xff]
    %v234 = vld [vmem:[#allocation3 + $0x110] sm:$0xff]
    %v235 = vld [vmem:[#allocation3 + $0x118] sm:$0xff]
    %v236 = vld [vmem:[#allocation3 + $0x120] sm:$0xff]
    %v237 = vld [vmem:[#allocation3 + $0x128] sm:$0xff]
    %v238 = vld [vmem:[#allocation3 + $0x130] sm:$0xff]
    %v239 = vld [vmem:[#allocation3 + $0x138] sm:$0xff]
    %v241 = vsel %vm119, %v198, 0
    %v244 = vsel %vm119, %v199, 0
    %246 = vmatprep.subr.mxu0 %v201
    %247 = vmatpush1.msra.mxu0 %v200
    %248 = vmatprep.subr.mxu0 %v205
    %249 = vmatpush1.msra.mxu0 %v204
    %250 = vmatprep.subr.mxu0 %v209
    %251 = vmatpush1.msra.mxu0 %v208
    %252 = vmatprep.subr.mxu0 %v213
    %253 = vmatpush1.msra.mxu0 %v212
    %254 = vmatprep.subr.mxu0 %v217
    %255 = vmatpush1.msra.mxu0 %v216
    %256 = vmatprep.subr.mxu0 %v221
    %257 = vmatpush1.msra.mxu0 %v220
    %258 = vmatprep.subr.mxu0 %v225
    %259 = vmatpush1.msra.mxu0 %v224
    %260 = vmatprep.subr.mxu0 %v229
    %261 = vmatpush1.msra.mxu0 %v228
    %262 = vmatprep.subr.mxu0 %v233
    %263 = vmatpush1.msra.mxu0 %v232
    %264 = vmatprep.subr.mxu0 %v237
    %265 = vmatpush1.msra.mxu0 %v236
    %266 = vmatprep.subr.mxu0 0.0
    %267 = vmatpush1.msra.mxu0 0.0
    %268 = vmatprep.subr.mxu0 0.0
    %269 = vmatpush1.msra.mxu0 0.0
    %270 = vmatprep.subr.mxu0 0.0
    %271 = vmatpush1.msra.mxu0 0.0
    %272 = vmatprep.subr.mxu0 0.0
    %273 = vmatpush1.msra.mxu0 0.0
    %274 = vmatprep.subr.mxu0 0.0
    %275 = vmatpush1.msra.mxu0 0.0
    %276 = vmatprep.subr.mxu0 0.0
    %277 = vmatpush1.msra.mxu0 0.0
    %278 = vmatprep.subr.mxu0 0.0
    %279 = vmatpush1.msra.mxu0 0.0
    %280 = vmatprep.subr.mxu0 0.0
    %281 = vmatpush1.msra.mxu0 0.0
    %282 = vmatprep.subr.mxu0 0.0
    %283 = vmatpush1.msra.mxu0 0.0
    %284 = vmatprep.subr.mxu0 0.0
    %285 = vmatpush1.msra.mxu0 0.0
    %286 = vmatprep.subr.mxu0 0.0
    %287 = vmatpush1.msra.mxu0 0.0
    %288 = vmatprep.subr.mxu0 0.0
    %289 = vmatpush1.msra.mxu0 0.0
    %290 = vmatprep.subr.mxu0 0.0
    %291 = vmatpush1.msra.mxu0 0.0
    %292 = vmatprep.subr.mxu0 0.0
    %293 = vmatpush1.msra.mxu0 0.0
    %294 = vmatprep.subr.mxu0 0.0
    %295 = vmatpush1.msra.mxu0 0.0
    %296 = vmatprep.subr.mxu0 0.0
    %297 = vmatpush1.msra.mxu0 0.0
    %298 = vmatprep.subr.mxu0 0.0
    %299 = vmatpush1.msra.mxu0 0.0
    %300 = vmatprep.subr.mxu0 0.0
    %301 = vmatpush1.msra.mxu0 0.0
    %302 = vmatprep.subr.mxu0 0.0
    %303 = vmatpush1.msra.mxu0 0.0
    %304 = vmatprep.subr.mxu0 0.0
    %305 = vmatpush1.msra.mxu0 0.0
    %306 = vmatprep.subr.mxu0 0.0
    %307 = vmatpush1.msra.mxu0 0.0
    %308 = vmatprep.subr.mxu0 0.0
    %309 = vmatpush1.msra.mxu0 0.0
    %310 = vmatprep.mubr.f32.mxu0 0.0
    %311 = vmatmul.mubr.f32.gmra.mrb[0].mxu0 %v241
    %v312 = vpop.f32.mrb[0].mxu0
    %v313 = vadd.f32 0.0, %v312
    %v314 = vpop.f32.mrb[0].mxu0
    %v315 = vadd.f32 0.0, %v314
    %316 = vmatprep.mubr.f32.mxu0 0.0
    %317 = vmatmul.mubr.f32.gmra.mrb[0].mxu0 %v244
    %v318 = vpop.f32.mrb[0].mxu0
    %v319 = vadd.f32 0.0, %v318
    %v320 = vpop.f32.mrb[0].mxu0
    %v321 = vadd.f32 0.0, %v320
    %322 = vdwg.mxu0
    %323 = vmatprep.subr.mxu0 %v203
    %324 = vmatpush1.msra.mxu0 %v202
    %325 = vmatprep.subr.mxu0 %v207
    %326 = vmatpush1.msra.mxu0 %v206
    %327 = vmatprep.subr.mxu0 %v211
    %328 = vmatpush1.msra.mxu0 %v210
    %329 = vmatprep.subr.mxu0 %v215
    %330 = vmatpush1.msra.mxu0 %v214
    %331 = vmatprep.subr.mxu0 %v219
    %332 = vmatpush1.msra.mxu0 %v218
    %333 = vmatprep.subr.mxu0 %v223
    %334 = vmatpush1.msra.mxu0 %v222
    %335 = vmatprep.subr.mxu0 %v227
    %336 = vmatpush1.msra.mxu0 %v226
    %337 = vmatprep.subr.mxu0 %v231
    %338 = vmatpush1.msra.mxu0 %v230
    %339 = vmatprep.subr.mxu0 %v235
    %340 = vmatpush1.msra.mxu0 %v234
    %341 = vmatprep.subr.mxu0 %v239
    %342 = vmatpush1.msra.mxu0 %v238
    %343 = vmatprep.subr.mxu0 0.0
    %344 = vmatpush1.msra.mxu0 0.0
    %345 = vmatprep.subr.mxu0 0.0
    %346 = vmatpush1.msra.mxu0 0.0
    %347 = vmatprep.subr.mxu0 0.0
    %348 = vmatpush1.msra.mxu0 0.0
    %349 = vmatprep.subr.mxu0 0.0
    %350 = vmatpush1.msra.mxu0 0.0
    %351 = vmatprep.subr.mxu0 0.0
    %352 = vmatpush1.msra.mxu0 0.0
    %353 = vmatprep.subr.mxu0 0.0
    %354 = vmatpush1.msra.mxu0 0.0
    %355 = vmatprep.subr.mxu0 0.0
    %356 = vmatpush1.msra.mxu0 0.0
    %357 = vmatprep.subr.mxu0 0.0
    %358 = vmatpush1.msra.mxu0 0.0
    %359 = vmatprep.subr.mxu0 0.0
    %360 = vmatpush1.msra.mxu0 0.0
    %361 = vmatprep.subr.mxu0 0.0
    %362 = vmatpush1.msra.mxu0 0.0
    %363 = vmatprep.subr.mxu0 0.0
    %364 = vmatpush1.msra.mxu0 0.0
    %365 = vmatprep.subr.mxu0 0.0
    %366 = vmatpush1.msra.mxu0 0.0
    %367 = vmatprep.subr.mxu0 0.0
    %368 = vmatpush1.msra.mxu0 0.0
    %369 = vmatprep.subr.mxu0 0.0
    %370 = vmatpush1.msra.mxu0 0.0
    %371 = vmatprep.subr.mxu0 0.0
    %372 = vmatpush1.msra.mxu0 0.0
    %373 = vmatprep.subr.mxu0 0.0
    %374 = vmatpush1.msra.mxu0 0.0
    %375 = vmatprep.subr.mxu0 0.0
    %376 = vmatpush1.msra.mxu0 0.0
    %377 = vmatprep.subr.mxu0 0.0
    %378 = vmatpush1.msra.mxu0 0.0
    %379 = vmatprep.subr.mxu0 0.0
    %380 = vmatpush1.msra.mxu0 0.0
    %381 = vmatprep.subr.mxu0 0.0
    %382 = vmatpush1.msra.mxu0 0.0
    %383 = vmatprep.subr.mxu0 0.0
    %384 = vmatpush1.msra.mxu0 0.0
    %385 = vmatprep.subr.mxu0 0.0
    %386 = vmatpush1.msra.mxu0 0.0
    %387 = vmatprep.mubr.f32.mxu0 0.0
    %388 = vmatmul.mubr.f32.gmra.mrb[0].mxu0 %v241
    %v389 = vpop.f32.mrb[0].mxu0
    %v390 = vadd.f32 0.0, %v389
    %v391 = vpop.f32.mrb[0].mxu0
    %v392 = vadd.f32 0.0, %v391
    %393 = vmatprep.mubr.f32.mxu0 0.0
    %394 = vmatmul.mubr.f32.gmra.mrb[0].mxu0 %v244
    %v395 = vpop.f32.mrb[0].mxu0
    %v396 = vadd.f32 0.0, %v395
    %v397 = vpop.f32.mrb[0].mxu0
    %v398 = vadd.f32 0.0, %v397
    %399 = vdwg.mxu0
    %400 = vst [vmem:[#allocation6] sm:$0xff] %v313
    %401 = vst [vmem:[#allocation6 + $0x8] sm:$0xff] %v315
    %402 = vst [vmem:[#allocation6 + $0x10] sm:$0xff] %v390
    %403 = vst [vmem:[#allocation6 + $0x18] sm:$0xff] %v392
    %404 = vst [vmem:[#allocation6 + $0x20] sm:$0xff] %v319
    %405 = vst [vmem:[#allocation6 + $0x28] sm:$0xff] %v321
    %406 = vst [vmem:[#allocation6 + $0x30] sm:$0xff] %v396
    %407 = vst [vmem:[#allocation6 + $0x38] sm:$0xff] %v398
    // Predicated region
    $region22: #{tpu_custom_call.1} parent=1 // pred_check
      _
    $region23: #{tpu_custom_call.1} parent=1 // pred_check_branch
      %409 = sbr.rel (0) target = $region25
    $region24: #{tpu_custom_call.1} parent=1 // pred_region
      %s411 = ssub.s32 1024, 1024
      %412 = vsyncadd [#allocation5], %s411
      %s413 = sshll.u32 [#allocation6], 4
      %s414 = int_to_ptr.vmem [resolvable:$true] %s413
      %419 = dma.vmem_to_hbm [thread:$0]  %s414, 1024, %s4, [#allocation5], 512, 512, 32
    $region25: #{tpu_custom_call.1} parent=1 // pred_fallthru
      _
    // Predicated region
    $region26: #{tpu_custom_call.1} parent=1 // pred_check
      _
    $region27: #{tpu_custom_call.1} parent=1 // pred_check_branch
      %421 = sbr.rel (0) target = $region29
    $region28: #{tpu_custom_call.1} parent=1 // pred_region
      %422 = dma.done [#allocation5], 1024
    $region29: #{tpu_custom_call.1} parent=1 // pred_fallthru
      _
    %423 = vsyncpa [#allocation4], 1
    %424 = vsyncpa [#allocation5], 1

</llo_original>
